<compile_context>
chip_gen: v5e
topology: v5e:2x2
jax: 0.10.0
libtpu: 0.0.40
codegen_flags: <defaults>
</compile_context>

<pallas_src>
import jax
import jax.numpy as jnp
from jax.experimental import pallas as pl
from jax.experimental.pallas import tpu as pltpu


def decoder_kernel(emb_ref, state_ref, kv_ref,
                   wg0_ref, bg0_ref,
                   wq_ref, bq_ref, wkv_ref, bkv_ref, wo_ref, bo_ref,
                   wg1_ref, bg1_ref, wout_ref, bout_ref,
                   pred_ref, attnw_ref, state_out_ref):
    bs = emb_ref.shape[0]
    H = wq_ref.shape[0]
    S = kv_ref.shape[0] // bs
    bf16 = jnp.bfloat16
    f32 = jnp.float32

    # Packed recurrent state: [h0 | h1 | c0 | c1] along lanes, (bs, 4H) f32.
    state = state_ref[...]
    h0 = state[:, 0:H]
    h1 = state[:, H:2 * H]
    c0 = state[:, 2 * H:3 * H]
    c1 = state[:, 3 * H:4 * H]

    def lstm_cell(x_bf, h, c, wg_ref, bg_ref):
        # One fused [x|h] @ [Wih; Whh] gate matmul (gate order i, f, g, o).  The
        # g-gate pre-activation was scaled by 2 in the wrapper, so
        # tanh(g) == 2*sigmoid(z_g) - 1 -> a single full-width sigmoid (EUP) pass.
        xh = jnp.concatenate([x_bf, h.astype(bf16)], axis=1)          # (bs, in+H)
        z = jnp.dot(xh, wg_ref[...], preferred_element_type=f32) + bg_ref[...]
        s = jax.nn.sigmoid(z)                                         # f32 (v5e-safe)
        lane = jax.lax.broadcasted_iota(jnp.int32, s.shape, 1)
        act = jnp.where((lane >= 2 * H) & (lane < 3 * H), 2.0 * s - 1.0, s)
        i = act[:, 0:H]
        f = act[:, H:2 * H]
        g = act[:, 2 * H:3 * H]
        o = act[:, 3 * H:4 * H]
        c_new = f * c + i * g
        h_new = o * jnp.tanh(c_new)
        return h_new, c_new

    # ---- attention K/V projections: hoisted, ONE block-diag matmul -------------
    kv_p = jnp.dot(kv_ref[...], wkv_ref[...], preferred_element_type=f32) + bkv_ref[...]
    k_p = kv_p[:, 0:H].astype(bf16)              # (bs*S, H) bf16 MXU operand
    v_p = kv_p[:, H:2 * H].astype(bf16)          # (bs*S, H) bf16 MXU operand

    # ---- LSTM layer 0 (decoder step, seq_len == 1) ------------------------------
    h0n, c0n = lstm_cell(emb_ref[...], h0, c0, wg0_ref, bg0_ref)

    # ---- single-head MultiheadAttention (query = LSTM0 output) ------------------
    # 1/sqrt(H) already folded into wq / bq in the wrapper.  bf16 operands,
    # f32 accumulation on the MXU.
    q = (jnp.dot(h0n.astype(bf16), wq_ref[...], preferred_element_type=f32)
         + bq_ref[...]).astype(bf16)                                  # (bs, H)
    scores = jax.lax.dot_general(q, k_p, (((1,), (1,)), ((), ())),
                                 preferred_element_type=f32)          # (bs, bs*S)
    row = jax.lax.broadcasted_iota(jnp.int32, scores.shape, 0)
    col = jax.lax.broadcasted_iota(jnp.int32, scores.shape, 1)
    valid = (col >= row * S) & (col < row * S + S)   # block-diagonal batch mask
    scores = jnp.where(valid, scores, -1e30)         # f32 mask -> exp underflows to 0
    m = jnp.max(scores, axis=-1, keepdims=True)
    e = jnp.exp(scores - m)                          # masked lanes -> exactly 0
    attn = e * pl.reciprocal(jnp.sum(e, axis=-1, keepdims=True), approx=True)

    # In-kernel compaction of the attention weights (static slices, bs stores) —
    # removes the wrapper-side reshape+sum and its (bs, bs*S) HBM round-trip.
    for b in range(bs):
        attnw_ref[b:b + 1, :] = attn[b:b + 1, b * S:(b + 1) * S]

    ctx = jnp.dot(attn.astype(bf16), v_p, preferred_element_type=f32)  # (bs, H)
    attn_out = jnp.dot(ctx.astype(bf16), wo_ref[...],
                       preferred_element_type=f32) + bo_ref[...]

    # ---- LSTM layer 1 ------------------------------------------------------------
    h1n, c1n = lstm_cell(attn_out.astype(bf16), h1, c1, wg1_ref, bg1_ref)

    # ---- output projection (vocab lanes -> lane-dense store) ----------------------
    pred_ref[...] = (jnp.dot(h1n.astype(bf16), wout_ref[...],
                             preferred_element_type=f32) + bout_ref[...])

    # Single packed, lane-dense state store: [h0n | h1n | c0n | c1n] = (bs, 4H)
    # (exactly 128 lanes at H=32 -> one unmasked vst).
    state_out_ref[...] = jnp.concatenate([h0n, h1n, c0n, c1n], axis=1)


def _decoder_forward_impl(params, input_ids, hidden, cell, k, v):
    bs = input_ids.shape[0]
    H = hidden.shape[-1]
    vocab = params['w_out'].shape[0]
    S = k.shape[0]
    kdim = k.shape[-1]
    vdim = v.shape[-1]
    bf16 = jnp.bfloat16
    f32 = jnp.float32

    # glue: embedding gather + layout prep; dropout = identity (eval mode).
    emb = params['embedding'][input_ids].astype(bf16)                  # (bs, emb_dim)

    # Packed recurrent state [h0 | h1 | c0 | c1]; aliased to the packed state output.
    state_in = jnp.concatenate([hidden[0], hidden[1], cell[0], cell[1]],
                               axis=1).astype(f32)                     # (bs, 4H)

    # Batch-major K|V, feature-concatenated so the kernel does ONE projection matmul.
    k2 = jnp.transpose(k, (1, 0, 2)).reshape(bs * S, kdim)
    v2 = jnp.transpose(v, (1, 0, 2)).reshape(bs * S, vdim)
    kv2 = jnp.concatenate([k2, v2], axis=1).astype(bf16)               # (bs*S, kdim+vdim)

    # Fold tanh(g) = 2*sigmoid(2g)-1 by scaling the g-gate columns by 2.
    gate_scale = jnp.concatenate([jnp.ones((2 * H,), f32),
                                  2.0 * jnp.ones((H,), f32),
                                  jnp.ones((H,), f32)])

    def gate_w(w_ih, w_hh):      # torch (4H,in),(4H,H) -> ((in+H), 4H), g cols x2, bf16
        w = jnp.concatenate([w_ih, w_hh], axis=1)                      # (4H, in+H)
        return (w.T * gate_scale[None, :]).astype(bf16)

    def gate_b(b_ih, b_hh):
        return (((b_ih + b_hh) * gate_scale)[None, :]).astype(f32)

    qscale = 1.0 / (H ** 0.5)

    # Block-diagonal [[wk, 0], [0, wv]] so K and V are projected by one MXU matmul.
    wkv = jnp.zeros((kdim + vdim, 2 * H), f32)
    wkv = wkv.at[:kdim, :H].set(params['wk'].T)
    wkv = wkv.at[kdim:, H:].set(params['wv'].T)
    bkv = jnp.concatenate([params['bk'], params['bv']])[None, :].astype(f32)

    args = (
        emb, state_in, kv2,
        gate_w(params['w_ih0'], params['w_hh0']),
        gate_b(params['b_ih0'], params['b_hh0']),
        (params['wq'].T * qscale).astype(bf16),
        ((params['bq'] * qscale)[None, :]).astype(f32),
        wkv.astype(bf16), bkv,
        params['wo'].T.astype(bf16), params['bo'][None, :].astype(f32),
        gate_w(params['w_ih1'], params['w_hh1']),
        gate_b(params['b_ih1'], params['b_hh1']),
        params['w_out'].T.astype(bf16), params['b_out'][None, :].astype(f32),
    )

    out_shapes = (
        jax.ShapeDtypeStruct((bs, vocab), f32),        # prediction
        jax.ShapeDtypeStruct((bs, S), f32),            # compact attention weights
        jax.ShapeDtypeStruct((bs, 4 * H), f32),        # packed [h0|h1|c0|c1]
    )
    vmem = lambda: pl.BlockSpec(memory_space=pltpu.MemorySpace.VMEM)
    pred, attn, state_out = pl.pallas_call(
        decoder_kernel,
        out_shape=out_shapes,
        in_specs=[vmem() for _ in args],
        out_specs=tuple(vmem() for _ in out_shapes),
        input_output_aliases={1: 2},                   # state_in -> packed state out
    )(*args)

    # Cheap glue: unpack state to the module's (2, bs, H) hidden / cell layout.
    hid = jnp.stack([state_out[:, :H], state_out[:, H:2 * H]])
    cel = jnp.stack([state_out[:, 2 * H:3 * H], state_out[:, 3 * H:]])
    return pred, attn[:, None, :], hid, cel


decoder_forward = jax.jit(_decoder_forward_impl)


def decoder_reference(params, input_ids, hidden, cell, k, v):
    """Pure-JAX reference mirroring PyTorch Decoder.forward (eval mode)."""
    emb = params['embedding'][input_ids]

    def lstm(x, h, c, w_ih, w_hh, b_ih, b_hh):
        H = h.shape[-1]
        gates = x @ w_ih.T + b_ih + h @ w_hh.T + b_hh
        i = jax.nn.sigmoid(gates[:, :H])
        f = jax.nn.sigmoid(gates[:, H:2 * H])
        g = jnp.tanh(gates[:, 2 * H:3 * H])
        o = jax.nn.sigmoid(gates[:, 3 * H:])
        c_new = f * c + i * g
        return o * jnp.tanh(c_new), c_new

    h0n, c0n = lstm(emb, hidden[0], cell[0],
                    params['w_ih0'], params['w_hh0'], params['b_ih0'], params['b_hh0'])
    H = h0n.shape[-1]
    q = h0n @ params['wq'].T + params['bq']
    kb = jnp.transpose(k, (1, 0, 2))
    vb = jnp.transpose(v, (1, 0, 2))
    k_p = kb @ params['wk'].T + params['bk']
    v_p = vb @ params['wv'].T + params['bv']
    scores = jnp.einsum('bh,bsh->bs', q * (1.0 / (H ** 0.5)), k_p)
    attn = jax.nn.softmax(scores, axis=-1)
    ctx = jnp.einsum('bs,bsh->bh', attn, v_p)
    attn_out = ctx @ params['wo'].T + params['bo']
    h1n, c1n = lstm(attn_out, hidden[1], cell[1],
                    params['w_ih1'], params['w_hh1'], params['b_ih1'], params['b_hh1'])
    pred = h1n @ params['w_out'].T + params['b_out']
    return pred, attn[:, None, :], jnp.stack([h0n, h1n]), jnp.stack([c0n, c1n])


def init_params(key, vocab, emb_dim, hid_dim, kdim, vdim):
    ks = jax.random.split(key, 19)

    def u(k, shape, scale=0.1):
        return jax.random.uniform(k, shape, jnp.float32, -scale, scale)

    return dict(
        embedding=u(ks[0], (vocab, emb_dim), 0.5),
        w_ih0=u(ks[1], (4 * hid_dim, emb_dim)),
        w_hh0=u(ks[2], (4 * hid_dim, hid_dim)),
        b_ih0=u(ks[3], (4 * hid_dim,)),
        b_hh0=u(ks[4], (4 * hid_dim,)),
        wq=u(ks[5], (hid_dim, hid_dim)),
        wk=u(ks[6], (hid_dim, kdim)),
        wv=u(ks[7], (hid_dim, vdim)),
        bq=u(ks[8], (hid_dim,)),
        bk=u(ks[9], (hid_dim,)),
        bv=u(ks[10], (hid_dim,)),
        wo=u(ks[11], (hid_dim, hid_dim)),
        bo=u(ks[12], (hid_dim,)),
        w_ih1=u(ks[13], (4 * hid_dim, hid_dim)),
        w_hh1=u(ks[14], (4 * hid_dim, hid_dim)),
        b_ih1=u(ks[15], (4 * hid_dim,)),
        b_hh1=u(ks[16], (4 * hid_dim,)),
        w_out=u(ks[17], (vocab, hid_dim)),
        b_out=u(ks[18], (vocab,)),
    )


if __name__ == "__main__":
    vocab, emb_dim, hid_dim, kdim, vdim = 128, 32, 32, 64, 64
    bs, S = 2, 49

    key = jax.random.PRNGKey(0)
    kp, ki, kh, kc, kk, kv = jax.random.split(key, 6)
    params = init_params(kp, vocab, emb_dim, hid_dim, kdim, vdim)

    input_ids = jax.random.randint(ki, (bs,), 0, vocab)
    hidden = jax.random.uniform(kh, (2, bs, hid_dim), jnp.float32, -0.1, 0.1)
    cell = jax.random.uniform(kc, (2, bs, hid_dim), jnp.float32, -0.1, 0.1)
    k = jax.random.uniform(kk, (S, bs, kdim), jnp.float32, -0.5, 0.5)
    v = jax.random.uniform(kv, (S, bs, vdim), jnp.float32, -0.5, 0.5)

    outs = decoder_forward(params, input_ids, hidden, cell, k, v)
    outs = jax.block_until_ready(outs)

    refs = decoder_reference(params, input_ids, hidden, cell, k, v)
    for o, r in zip(outs, refs):
        assert o.shape == r.shape and o.dtype == r.dtype, (o.shape, r.shape, o.dtype, r.dtype)
        assert jnp.allclose(o, r, atol=2e-2, rtol=2e-2), float(jnp.max(jnp.abs(o - r)))

    print("KERNEL_OK")
</pallas_src>

<mosaic_0001>
module attributes {stable_mosaic.version = 11 : i64} {
  func.func @decoder_kernel(%arg0: memref<2x32xbf16, #tpu.memory_space<vmem>>, %arg1: memref<2x128xf32, #tpu.memory_space<vmem>>, %arg2: memref<98x128xbf16, #tpu.memory_space<vmem>>, %arg3: memref<64x128xbf16, #tpu.memory_space<vmem>>, %arg4: memref<1x128xf32, #tpu.memory_space<vmem>>, %arg5: memref<32x32xbf16, #tpu.memory_space<vmem>>, %arg6: memref<1x32xf32, #tpu.memory_space<vmem>>, %arg7: memref<128x64xbf16, #tpu.memory_space<vmem>>, %arg8: memref<1x64xf32, #tpu.memory_space<vmem>>, %arg9: memref<32x32xbf16, #tpu.memory_space<vmem>>, %arg10: memref<1x32xf32, #tpu.memory_space<vmem>>, %arg11: memref<64x128xbf16, #tpu.memory_space<vmem>>, %arg12: memref<1x128xf32, #tpu.memory_space<vmem>>, %arg13: memref<32x128xbf16, #tpu.memory_space<vmem>>, %arg14: memref<1x128xf32, #tpu.memory_space<vmem>>, %arg15: memref<2x128xf32, #tpu.memory_space<vmem>>, %arg16: memref<2x49xf32, #tpu.memory_space<vmem>>, %arg17: memref<2x128xf32, #tpu.memory_space<vmem>>) attributes {dimension_semantics = [], scalar_prefetch = 0 : i64, scratch_operands = 0 : i64, tpu.core_type = #tpu.core_type<tc>} {
    %c0 = arith.constant 0 : index
    %c0_0 = arith.constant 0 : index
    %0 = vector.load %arg1[%c0, %c0_0] : memref<2x128xf32, #tpu.memory_space<vmem>>, vector<2x128xf32>
    %1 = vector.extract_strided_slice %0 {offsets = [0, 0], sizes = [2, 32], strides = [1, 1]} : vector<2x128xf32> to vector<2x32xf32>
    %2 = vector.extract_strided_slice %0 {offsets = [0, 32], sizes = [2, 32], strides = [1, 1]} : vector<2x128xf32> to vector<2x32xf32>
    %3 = vector.extract_strided_slice %0 {offsets = [0, 64], sizes = [2, 32], strides = [1, 1]} : vector<2x128xf32> to vector<2x32xf32>
    %4 = vector.extract_strided_slice %0 {offsets = [0, 96], sizes = [2, 32], strides = [1, 1]} : vector<2x128xf32> to vector<2x32xf32>
    %c0_1 = arith.constant 0 : index
    %c0_2 = arith.constant 0 : index
    %5 = vector.load %arg2[%c0_1, %c0_2] : memref<98x128xbf16, #tpu.memory_space<vmem>>, vector<98x128xbf16>
    %c0_3 = arith.constant 0 : index
    %c0_4 = arith.constant 0 : index
    %6 = vector.load %arg7[%c0_3, %c0_4] : memref<128x64xbf16, #tpu.memory_space<vmem>>, vector<128x64xbf16>
    %cst = arith.constant dense<0.000000e+00> : vector<98x64xf32>
    %7 = tpu.matmul %5, %6, %cst {dimension_numbers = #tpu.dot_dimension_numbers<[1], [0], [0], [1], [0, 0, 1, 1], [], []>} : vector<98x128xbf16>, vector<128x64xbf16>, vector<98x64xf32> -> vector<98x64xf32>
    %c0_5 = arith.constant 0 : index
    %c0_6 = arith.constant 0 : index
    %8 = vector.load %arg8[%c0_5, %c0_6] : memref<1x64xf32, #tpu.memory_space<vmem>>, vector<1x64xf32>
    %9 = vector.broadcast %8 : vector<1x64xf32> to vector<98x64xf32>
    %10 = arith.addf %7, %9 : vector<98x64xf32>
    %11 = vector.extract_strided_slice %10 {offsets = [0, 0], sizes = [98, 32], strides = [1, 1]} : vector<98x64xf32> to vector<98x32xf32>
    %12 = arith.truncf %11 : vector<98x32xf32> to vector<98x32xbf16>
    %13 = vector.extract_strided_slice %10 {offsets = [0, 32], sizes = [98, 32], strides = [1, 1]} : vector<98x64xf32> to vector<98x32xf32>
    %14 = arith.truncf %13 : vector<98x32xf32> to vector<98x32xbf16>
    %c0_7 = arith.constant 0 : index
    %c0_8 = arith.constant 0 : index
    %15 = vector.load %arg0[%c0_7, %c0_8] : memref<2x32xbf16, #tpu.memory_space<vmem>>, vector<2x32xbf16>
    %16 = arith.truncf %1 : vector<2x32xf32> to vector<2x32xbf16>
    %17 = tpu.concatenate %15, %16 in 1 : vector<2x32xbf16>, vector<2x32xbf16> -> vector<2x64xbf16>
    %c0_9 = arith.constant 0 : index
    %c0_10 = arith.constant 0 : index
    %18 = vector.load %arg3[%c0_9, %c0_10] : memref<64x128xbf16, #tpu.memory_space<vmem>>, vector<64x128xbf16>
    %cst_11 = arith.constant dense<0.000000e+00> : vector<2x128xf32>
    %19 = tpu.matmul %17, %18, %cst_11 {dimension_numbers = #tpu.dot_dimension_numbers<[1], [0], [0], [1], [0, 0, 1, 1], [], []>} : vector<2x64xbf16>, vector<64x128xbf16>, vector<2x128xf32> -> vector<2x128xf32>
    %c0_12 = arith.constant 0 : index
    %c0_13 = arith.constant 0 : index
    %20 = vector.load %arg4[%c0_12, %c0_13] : memref<1x128xf32, #tpu.memory_space<vmem>>, vector<1x128xf32>
    %21 = vector.broadcast %20 : vector<1x128xf32> to vector<2x128xf32>
    %22 = arith.addf %19, %21 : vector<2x128xf32>
    %23 = arith.negf %22 : vector<2x128xf32>
    %24 = math.exp %23 : vector<2x128xf32>
    %cst_14 = arith.constant 1.000000e+00 : f32
    %25 = vector.broadcast %cst_14 : f32 to vector<2x128xf32>
    %26 = arith.addf %25, %24 : vector<2x128xf32>
    %27 = arith.divf %25, %26 : vector<2x128xf32>
    %28 = tpu.iota {dimensions = array<i32: 1>} : vector<2x128xi32>
    %c64_i32 = arith.constant 64 : i32
    %29 = vector.broadcast %c64_i32 : i32 to vector<2x128xi32>
    %30 = arith.cmpi sge, %28, %29 : vector<2x128xi32>
    %c96_i32 = arith.constant 96 : i32
    %31 = vector.broadcast %c96_i32 : i32 to vector<2x128xi32>
    %32 = arith.cmpi slt, %28, %31 : vector<2x128xi32>
    %33 = arith.andi %30, %32 : vector<2x128xi1>
    %cst_15 = arith.constant 2.000000e+00 : f32
    %34 = vector.broadcast %cst_15 : f32 to vector<2x128xf32>
    %35 = arith.mulf %34, %27 : vector<2x128xf32>
    %cst_16 = arith.constant 1.000000e+00 : f32
    %36 = vector.broadcast %cst_16 : f32 to vector<2x128xf32>
    %37 = arith.subf %35, %36 : vector<2x128xf32>
    %38 = arith.select %33, %37, %27 : vector<2x128xi1>, vector<2x128xf32>
    %39 = vector.extract_strided_slice %38 {offsets = [0, 0], sizes = [2, 32], strides = [1, 1]} : vector<2x128xf32> to vector<2x32xf32>
    %40 = vector.extract_strided_slice %38 {offsets = [0, 32], sizes = [2, 32], strides = [1, 1]} : vector<2x128xf32> to vector<2x32xf32>
    %41 = vector.extract_strided_slice %38 {offsets = [0, 64], sizes = [2, 32], strides = [1, 1]} : vector<2x128xf32> to vector<2x32xf32>
    %42 = vector.extract_strided_slice %38 {offsets = [0, 96], sizes = [2, 32], strides = [1, 1]} : vector<2x128xf32> to vector<2x32xf32>
    %43 = arith.mulf %40, %3 : vector<2x32xf32>
    %44 = arith.mulf %39, %41 : vector<2x32xf32>
    %45 = arith.addf %43, %44 : vector<2x32xf32>
    %46 = math.tanh %45 : vector<2x32xf32>
    %47 = arith.mulf %42, %46 : vector<2x32xf32>
    %48 = arith.truncf %47 : vector<2x32xf32> to vector<2x32xbf16>
    %c0_17 = arith.constant 0 : index
    %c0_18 = arith.constant 0 : index
    %49 = vector.load %arg5[%c0_17, %c0_18] : memref<32x32xbf16, #tpu.memory_space<vmem>>, vector<32x32xbf16>
    %cst_19 = arith.constant dense<0.000000e+00> : vector<2x32xf32>
    %50 = tpu.matmul %48, %49, %cst_19 {dimension_numbers = #tpu.dot_dimension_numbers<[1], [0], [0], [1], [0, 0, 1, 1], [], []>} : vector<2x32xbf16>, vector<32x32xbf16>, vector<2x32xf32> -> vector<2x32xf32>
    %c0_20 = arith.constant 0 : index
    %c0_21 = arith.constant 0 : index
    %51 = vector.load %arg6[%c0_20, %c0_21] : memref<1x32xf32, #tpu.memory_space<vmem>>, vector<1x32xf32>
    %52 = vector.broadcast %51 : vector<1x32xf32> to vector<2x32xf32>
    %53 = arith.addf %50, %52 : vector<2x32xf32>
    %54 = arith.truncf %53 : vector<2x32xf32> to vector<2x32xbf16>
    %cst_22 = arith.constant dense<0.000000e+00> : vector<2x98xf32>
    %55 = tpu.matmul %54, %12, %cst_22 {dimension_numbers = #tpu.dot_dimension_numbers<[1], [1], [0], [0], [0, 0, 1, 0], [], []>} : vector<2x32xbf16>, vector<98x32xbf16>, vector<2x98xf32> -> vector<2x98xf32>
    %56 = tpu.iota {dimensions = array<i32: 0>} : vector<2x98xi32>
    %57 = tpu.iota {dimensions = array<i32: 1>} : vector<2x98xi32>
    %c49_i32 = arith.constant 49 : i32
    %58 = vector.broadcast %c49_i32 : i32 to vector<2x98xi32>
    %59 = arith.muli %56, %58 : vector<2x98xi32>
    %60 = arith.cmpi sge, %57, %59 : vector<2x98xi32>
    %c49_i32_23 = arith.constant 49 : i32
    %61 = vector.broadcast %c49_i32_23 : i32 to vector<2x98xi32>
    %62 = arith.muli %56, %61 : vector<2x98xi32>
    %c49_i32_24 = arith.constant 49 : i32
    %63 = vector.broadcast %c49_i32_24 : i32 to vector<2x98xi32>
    %64 = arith.addi %62, %63 : vector<2x98xi32>
    %65 = arith.cmpi slt, %57, %64 : vector<2x98xi32>
    %66 = arith.andi %60, %65 : vector<2x98xi1>
    %cst_25 = arith.constant -1.000000e+30 : f32
    %67 = vector.broadcast %cst_25 : f32 to vector<2x98xf32>
    %68 = arith.select %66, %55, %67 : vector<2x98xi1>, vector<2x98xf32>
    %cst_26 = arith.constant dense<0xFF800000> : vector<2xf32>
    %69 = vector.multi_reduction <maximumf>, %68, %cst_26 [1] : vector<2x98xf32> to vector<2xf32>
    %70 = vector.shape_cast %69 : vector<2xf32> to vector<2x1xf32>
    %71 = vector.broadcast %70 : vector<2x1xf32> to vector<2x98xf32>
    %72 = arith.subf %68, %71 : vector<2x98xf32>
    %73 = math.exp %72 : vector<2x98xf32>
    %cst_27 = arith.constant dense<0.000000e+00> : vector<2xf32>
    %74 = vector.multi_reduction <add>, %73, %cst_27 [1] : vector<2x98xf32> to vector<2xf32>
    %75 = vector.shape_cast %74 : vector<2xf32> to vector<2x1xf32>
    %76 = tpu.reciprocal %75 {approx = true} : vector<2x1xf32> -> vector<2x1xf32>
    %77 = vector.broadcast %76 : vector<2x1xf32> to vector<2x98xf32>
    %78 = arith.mulf %73, %77 : vector<2x98xf32>
    %79 = vector.extract_strided_slice %78 {offsets = [0, 0], sizes = [1, 49], strides = [1, 1]} : vector<2x98xf32> to vector<1x49xf32>
    %c0_28 = arith.constant 0 : index
    %c0_29 = arith.constant 0 : index
    %80 = vector.load %arg16[%c0_28, %c0_29] : memref<2x49xf32, #tpu.memory_space<vmem>>, vector<1x49xf32>
    tpu.vector_store %arg16[%c0_28, %c0_29], %79 {strides = array<i32>} : memref<2x49xf32, #tpu.memory_space<vmem>>, vector<1x49xf32>,
    %81 = vector.extract_strided_slice %78 {offsets = [1, 49], sizes = [1, 49], strides = [1, 1]} : vector<2x98xf32> to vector<1x49xf32>
    %c1 = arith.constant 1 : index
    %c0_30 = arith.constant 0 : index
    %82 = vector.load %arg16[%c1, %c0_30] : memref<2x49xf32, #tpu.memory_space<vmem>>, vector<1x49xf32>
    tpu.vector_store %arg16[%c1, %c0_30], %81 {strides = array<i32>} : memref<2x49xf32, #tpu.memory_space<vmem>>, vector<1x49xf32>,
    %83 = arith.truncf %78 : vector<2x98xf32> to vector<2x98xbf16>
    %cst_31 = arith.constant dense<0.000000e+00> : vector<2x32xf32>
    %84 = tpu.matmul %83, %14, %cst_31 {dimension_numbers = #tpu.dot_dimension_numbers<[1], [0], [0], [1], [0, 0, 1, 1], [], []>} : vector<2x98xbf16>, vector<98x32xbf16>, vector<2x32xf32> -> vector<2x32xf32>
    %85 = arith.truncf %84 : vector<2x32xf32> to vector<2x32xbf16>
    %c0_32 = arith.constant 0 : index
    %c0_33 = arith.constant 0 : index
    %86 = vector.load %arg9[%c0_32, %c0_33] : memref<32x32xbf16, #tpu.memory_space<vmem>>, vector<32x32xbf16>
    %cst_34 = arith.constant dense<0.000000e+00> : vector<2x32xf32>
    %87 = tpu.matmul %85, %86, %cst_34 {dimension_numbers = #tpu.dot_dimension_numbers<[1], [0], [0], [1], [0, 0, 1, 1], [], []>} : vector<2x32xbf16>, vector<32x32xbf16>, vector<2x32xf32> -> vector<2x32xf32>
    %c0_35 = arith.constant 0 : index
    %c0_36 = arith.constant 0 : index
    %88 = vector.load %arg10[%c0_35, %c0_36] : memref<1x32xf32, #tpu.memory_space<vmem>>, vector<1x32xf32>
    %89 = vector.broadcast %88 : vector<1x32xf32> to vector<2x32xf32>
    %90 = arith.addf %87, %89 : vector<2x32xf32>
    %91 = arith.truncf %90 : vector<2x32xf32> to vector<2x32xbf16>
    %92 = arith.truncf %2 : vector<2x32xf32> to vector<2x32xbf16>
    %93 = tpu.concatenate %91, %92 in 1 : vector<2x32xbf16>, vector<2x32xbf16> -> vector<2x64xbf16>
    %c0_37 = arith.constant 0 : index
    %c0_38 = arith.constant 0 : index
    %94 = vector.load %arg11[%c0_37, %c0_38] : memref<64x128xbf16, #tpu.memory_space<vmem>>, vector<64x128xbf16>
    %cst_39 = arith.constant dense<0.000000e+00> : vector<2x128xf32>
    %95 = tpu.matmul %93, %94, %cst_39 {dimension_numbers = #tpu.dot_dimension_numbers<[1], [0], [0], [1], [0, 0, 1, 1], [], []>} : vector<2x64xbf16>, vector<64x128xbf16>, vector<2x128xf32> -> vector<2x128xf32>
    %c0_40 = arith.constant 0 : index
    %c0_41 = arith.constant 0 : index
    %96 = vector.load %arg12[%c0_40, %c0_41] : memref<1x128xf32, #tpu.memory_space<vmem>>, vector<1x128xf32>
    %97 = vector.broadcast %96 : vector<1x128xf32> to vector<2x128xf32>
    %98 = arith.addf %95, %97 : vector<2x128xf32>
    %99 = arith.negf %98 : vector<2x128xf32>
    %100 = math.exp %99 : vector<2x128xf32>
    %cst_42 = arith.constant 1.000000e+00 : f32
    %101 = vector.broadcast %cst_42 : f32 to vector<2x128xf32>
    %102 = arith.addf %101, %100 : vector<2x128xf32>
    %103 = arith.divf %101, %102 : vector<2x128xf32>
    %104 = tpu.iota {dimensions = array<i32: 1>} : vector<2x128xi32>
    %c64_i32_43 = arith.constant 64 : i32
    %105 = vector.broadcast %c64_i32_43 : i32 to vector<2x128xi32>
    %106 = arith.cmpi sge, %104, %105 : vector<2x128xi32>
    %c96_i32_44 = arith.constant 96 : i32
    %107 = vector.broadcast %c96_i32_44 : i32 to vector<2x128xi32>
    %108 = arith.cmpi slt, %104, %107 : vector<2x128xi32>
    %109 = arith.andi %106, %108 : vector<2x128xi1>
    %cst_45 = arith.constant 2.000000e+00 : f32
    %110 = vector.broadcast %cst_45 : f32 to vector<2x128xf32>
    %111 = arith.mulf %110, %103 : vector<2x128xf32>
    %cst_46 = arith.constant 1.000000e+00 : f32
    %112 = vector.broadcast %cst_46 : f32 to vector<2x128xf32>
    %113 = arith.subf %111, %112 : vector<2x128xf32>
    %114 = arith.select %109, %113, %103 : vector<2x128xi1>, vector<2x128xf32>
    %115 = vector.extract_strided_slice %114 {offsets = [0, 0], sizes = [2, 32], strides = [1, 1]} : vector<2x128xf32> to vector<2x32xf32>
    %116 = vector.extract_strided_slice %114 {offsets = [0, 32], sizes = [2, 32], strides = [1, 1]} : vector<2x128xf32> to vector<2x32xf32>
    %117 = vector.extract_strided_slice %114 {offsets = [0, 64], sizes = [2, 32], strides = [1, 1]} : vector<2x128xf32> to vector<2x32xf32>
    %118 = vector.extract_strided_slice %114 {offsets = [0, 96], sizes = [2, 32], strides = [1, 1]} : vector<2x128xf32> to vector<2x32xf32>
    %119 = arith.mulf %116, %4 : vector<2x32xf32>
    %120 = arith.mulf %115, %117 : vector<2x32xf32>
    %121 = arith.addf %119, %120 : vector<2x32xf32>
    %122 = math.tanh %121 : vector<2x32xf32>
    %123 = arith.mulf %118, %122 : vector<2x32xf32>
    %124 = arith.truncf %123 : vector<2x32xf32> to vector<2x32xbf16>
    %c0_47 = arith.constant 0 : index
    %c0_48 = arith.constant 0 : index
    %125 = vector.load %arg13[%c0_47, %c0_48] : memref<32x128xbf16, #tpu.memory_space<vmem>>, vector<32x128xbf16>
    %cst_49 = arith.constant dense<0.000000e+00> : vector<2x128xf32>
    %126 = tpu.matmul %124, %125, %cst_49 {dimension_numbers = #tpu.dot_dimension_numbers<[1], [0], [0], [1], [0, 0, 1, 1], [], []>} : vector<2x32xbf16>, vector<32x128xbf16>, vector<2x128xf32> -> vector<2x128xf32>
    %c0_50 = arith.constant 0 : index
    %c0_51 = arith.constant 0 : index
    %127 = vector.load %arg14[%c0_50, %c0_51] : memref<1x128xf32, #tpu.memory_space<vmem>>, vector<1x128xf32>
    %128 = vector.broadcast %127 : vector<1x128xf32> to vector<2x128xf32>
    %129 = arith.addf %126, %128 : vector<2x128xf32>
    %c0_52 = arith.constant 0 : index
    %c0_53 = arith.constant 0 : index
    %130 = vector.load %arg15[%c0_52, %c0_53] : memref<2x128xf32, #tpu.memory_space<vmem>>, vector<2x128xf32>
    tpu.vector_store %arg15[%c0_52, %c0_53], %129 {strides = array<i32>} : memref<2x128xf32, #tpu.memory_space<vmem>>, vector<2x128xf32>,
    %131 = tpu.concatenate %47, %123, %45, %121 in 1 : vector<2x32xf32>, vector<2x32xf32>, vector<2x32xf32>, vector<2x32xf32> -> vector<2x128xf32>
    %c0_54 = arith.constant 0 : index
    %c0_55 = arith.constant 0 : index
    %132 = vector.load %arg17[%c0_54, %c0_55] : memref<2x128xf32, #tpu.memory_space<vmem>>, vector<2x128xf32>
    tpu.vector_store %arg17[%c0_54, %c0_55], %131 {strides = array<i32>} : memref<2x128xf32, #tpu.memory_space<vmem>>, vector<2x128xf32>,
    return
  }
}

</mosaic_0001>

<llo_original>
// kernel: _decoder_forward_impl.1
$region0: #{_decoder_forward_impl.1}
  #allocation0 [shape = 'u32[]', space=smem, size = 0x4, offset = 0x4, fixed_abs, tag = 'smem constant byte address 0x4 - core index']
  #allocation1 [shape = 'u32[72,128]{1,0:T(1,128)}', space=vmem, size = 0x9000, scoped, tag = 'internal scratch']
  %s0 = inlined_call_operand.vmem [shape: bf16[2,32], index: 0, kind: input, shape index: {}]
  %s1 = inlined_call_operand.vmem [shape: f32[2,128], index: 1, kind: input, shape index: {}, may-alias: {1,17}]
  %s2 = inlined_call_operand.vmem [shape: bf16[98,128], index: 2, kind: input, shape index: {}]
  %s3 = inlined_call_operand.vmem [shape: bf16[64,128], index: 3, kind: input, shape index: {}]
  %s4 = inlined_call_operand.vmem [shape: f32[1,128], index: 4, kind: input, shape index: {}]
  %s5 = inlined_call_operand.vmem [shape: bf16[32,32], index: 5, kind: input, shape index: {}]
  %s6 = inlined_call_operand.vmem [shape: f32[1,32], index: 6, kind: input, shape index: {}]
  %s7 = inlined_call_operand.vmem [shape: bf16[128,64], index: 7, kind: input, shape index: {}]
  %s8 = inlined_call_operand.vmem [shape: f32[1,64], index: 8, kind: input, shape index: {}]
  %s9 = inlined_call_operand.vmem [shape: bf16[32,32], index: 9, kind: input, shape index: {}]
  %s10 = inlined_call_operand.vmem [shape: f32[1,32], index: 10, kind: input, shape index: {}]
  %s11 = inlined_call_operand.vmem [shape: bf16[64,128], index: 11, kind: input, shape index: {}]
  %s12 = inlined_call_operand.vmem [shape: f32[1,128], index: 12, kind: input, shape index: {}]
  %s13 = inlined_call_operand.vmem [shape: bf16[32,128], index: 13, kind: input, shape index: {}]
  %s14 = inlined_call_operand.vmem [shape: f32[1,128], index: 14, kind: input, shape index: {}]
  %s15 = inlined_call_operand.hbm [shape: f32[2,128], index: 15, kind: output, shape index: {0}]
  %s16 = inlined_call_operand.hbm [shape: f32[2,49], index: 16, kind: output, shape index: {1}]
  %s17 = inlined_call_operand.vmem [shape: f32[2,128], index: 17, kind: output, shape index: {2}, may-alias: {1,17}]
  %18 = xla_tuple %s15, %s16, %s17
  %s19 = sld [smem:[#allocation0]]
  $region86: #{_decoder_forward_impl.1} parent=0
    _
  %s21 = ssub.s32 1, %s19
  %s22 = scalar_select 0, %s21, %s19
  $region1: #{_decoder_forward_impl.1} parent=0
    #allocation2 [shape = 'u8[1024]{0}', space=vmem, size = 0x400, scoped, tag = 'output window, operand 0, single buffered']
    #allocation3 [shape = 's32[1]{0}', space=sflag, size = 0x4, scoped, tag = 'scoped memory for _decoder_forward_impl.1']
    #allocation4 [shape = 'u8[1024]{0}', space=vmem, size = 0x400, scoped, tag = 'output window, operand 1, single buffered']
    #allocation5 [shape = 's32[1]{0}', space=sflag, size = 0x4, scoped, tag = 'scoped memory for _decoder_forward_impl.1']
    %23 = vsyncpa [#allocation3], 0
    %24 = vsyncpa [#allocation5], 0
    // Predicated region
    $region2: #{_decoder_forward_impl.1} parent=1 // pred_check
      _
    $region3: #{_decoder_forward_impl.1} parent=1 // pred_check_branch
      %26 = sbr.rel (0) target = $region5
    $region4: #{_decoder_forward_impl.1} parent=1 // pred_region
      _
    $region5: #{_decoder_forward_impl.1} parent=1 // pred_fallthru
      _
    // Predicated region
    $region6: #{_decoder_forward_impl.1} parent=1 // pred_check
      _
    $region7: #{_decoder_forward_impl.1} parent=1 // pred_check_branch
      %28 = sbr.rel (0) target = $region9
    $region8: #{_decoder_forward_impl.1} parent=1 // pred_region
      _
    $region9: #{_decoder_forward_impl.1} parent=1 // pred_fallthru
      _
    // Predicated region
    $region10: #{_decoder_forward_impl.1} parent=1 // pred_check
      _
    $region11: #{_decoder_forward_impl.1} parent=1 // pred_check_branch
      %30 = sbr.rel (0) target = $region13
    $region12: #{_decoder_forward_impl.1} parent=1 // pred_region
      _
    $region13: #{_decoder_forward_impl.1} parent=1 // pred_fallthru
      _
    // Predicated region
    $region14: #{_decoder_forward_impl.1} parent=1 // pred_check
      _
    $region15: #{_decoder_forward_impl.1} parent=1 // pred_check_branch
      %32 = sbr.rel (0) target = $region17
    $region16: #{_decoder_forward_impl.1} parent=1 // pred_region
      _
    $region17: #{_decoder_forward_impl.1} parent=1 // pred_fallthru
      _
    // Predicated region
    $region18: #{_decoder_forward_impl.1} parent=1 // pred_check
      _
    $region19: #{_decoder_forward_impl.1} parent=1 // pred_check_branch
      %34 = sbr.rel (0) target = $region21
    $region20: #{_decoder_forward_impl.1} parent=1 // pred_region
      _
    $region21: #{_decoder_forward_impl.1} parent=1 // pred_fallthru
      _
    // Predicated region
    $region22: #{_decoder_forward_impl.1} parent=1 // pred_check
      _
    $region23: #{_decoder_forward_impl.1} parent=1 // pred_check_branch
      %36 = sbr.rel (0) target = $region25
    $region24: #{_decoder_forward_impl.1} parent=1 // pred_region
      _
    $region25: #{_decoder_forward_impl.1} parent=1 // pred_fallthru
      _
    // Predicated region
    $region26: #{_decoder_forward_impl.1} parent=1 // pred_check
      _
    $region27: #{_decoder_forward_impl.1} parent=1 // pred_check_branch
      %38 = sbr.rel (0) target = $region29
    $region28: #{_decoder_forward_impl.1} parent=1 // pred_region
      _
    $region29: #{_decoder_forward_impl.1} parent=1 // pred_fallthru
      _
    // Predicated region
    $region30: #{_decoder_forward_impl.1} parent=1 // pred_check
      _
    $region31: #{_decoder_forward_impl.1} parent=1 // pred_check_branch
      %40 = sbr.rel (0) target = $region33
    $region32: #{_decoder_forward_impl.1} parent=1 // pred_region
      _
    $region33: #{_decoder_forward_impl.1} parent=1 // pred_fallthru
      _
    // Predicated region
    $region34: #{_decoder_forward_impl.1} parent=1 // pred_check
      _
    $region35: #{_decoder_forward_impl.1} parent=1 // pred_check_branch
      %42 = sbr.rel (0) target = $region37
    $region36: #{_decoder_forward_impl.1} parent=1 // pred_region
      _
    $region37: #{_decoder_forward_impl.1} parent=1 // pred_fallthru
      _
    // Predicated region
    $region38: #{_decoder_forward_impl.1} parent=1 // pred_check
      _
    $region39: #{_decoder_forward_impl.1} parent=1 // pred_check_branch
      %44 = sbr.rel (0) target = $region41
    $region40: #{_decoder_forward_impl.1} parent=1 // pred_region
      _
    $region41: #{_decoder_forward_impl.1} parent=1 // pred_fallthru
      _
    // Predicated region
    $region42: #{_decoder_forward_impl.1} parent=1 // pred_check
      _
    $region43: #{_decoder_forward_impl.1} parent=1 // pred_check_branch
      %46 = sbr.rel (0) target = $region45
    $region44: #{_decoder_forward_impl.1} parent=1 // pred_region
      _
    $region45: #{_decoder_forward_impl.1} parent=1 // pred_fallthru
      _
    // Predicated region
    $region46: #{_decoder_forward_impl.1} parent=1 // pred_check
      _
    $region47: #{_decoder_forward_impl.1} parent=1 // pred_check_branch
      %48 = sbr.rel (0) target = $region49
    $region48: #{_decoder_forward_impl.1} parent=1 // pred_region
      _
    $region49: #{_decoder_forward_impl.1} parent=1 // pred_fallthru
      _
    // Predicated region
    $region50: #{_decoder_forward_impl.1} parent=1 // pred_check
      _
    $region51: #{_decoder_forward_impl.1} parent=1 // pred_check_branch
      %50 = sbr.rel (0) target = $region53
    $region52: #{_decoder_forward_impl.1} parent=1 // pred_region
      _
    $region53: #{_decoder_forward_impl.1} parent=1 // pred_fallthru
      _
    // Predicated region
    $region54: #{_decoder_forward_impl.1} parent=1 // pred_check
      _
    $region55: #{_decoder_forward_impl.1} parent=1 // pred_check_branch
      %52 = sbr.rel (0) target = $region57
    $region56: #{_decoder_forward_impl.1} parent=1 // pred_region
      _
    $region57: #{_decoder_forward_impl.1} parent=1 // pred_fallthru
      _
    // Predicated region
    $region58: #{_decoder_forward_impl.1} parent=1 // pred_check
      _
    $region59: #{_decoder_forward_impl.1} parent=1 // pred_check_branch
      %54 = sbr.rel (0) target = $region61
    $region60: #{_decoder_forward_impl.1} parent=1 // pred_region
      _
    $region61: #{_decoder_forward_impl.1} parent=1 // pred_fallthru
      _
    %v56 = vld [vmem:[%s1] sm:$0x3]
    %v57 = vld [vmem:[%s2] sm:$0xf]
    %v58 = vld [vmem:[%s2 + $0x4] sm:$0xf]
    %v59 = vld [vmem:[%s2 + $0x8] sm:$0xf]
    %v60 = vld [vmem:[%s2 + $0xc] sm:$0xf]
    %v61 = vld [vmem:[%s2 + $0x10] sm:$0xf]
    %v62 = vld [vmem:[%s2 + $0x14] sm:$0xf]
    %v63 = vld [vmem:[%s2 + $0x18] sm:$0xf]
    %v64 = vld [vmem:[%s2 + $0x1c] sm:$0xf]
    %v65 = vld [vmem:[%s2 + $0x20] sm:$0xf]
    %v66 = vld [vmem:[%s2 + $0x24] sm:$0xf]
    %v67 = vld [vmem:[%s2 + $0x28] sm:$0xf]
    %v68 = vld [vmem:[%s2 + $0x2c] sm:$0xf]
    %v69 = vld [vmem:[%s2 + $0x30] sm:$0x1]
    %v70 = vld [vmem:[%s7] sm:$0xf]
    %v71 = vld [vmem:[%s7 + $0x4] sm:$0xf]
    %v72 = vld [vmem:[%s7 + $0x8] sm:$0xf]
    %v73 = vld [vmem:[%s7 + $0xc] sm:$0xf]
    %v74 = vld [vmem:[%s7 + $0x10] sm:$0xf]
    %v75 = vld [vmem:[%s7 + $0x14] sm:$0xf]
    %v76 = vld [vmem:[%s7 + $0x18] sm:$0xf]
    %v77 = vld [vmem:[%s7 + $0x1c] sm:$0xf]
    %v78 = vld [vmem:[%s7 + $0x20] sm:$0xf]
    %v79 = vld [vmem:[%s7 + $0x24] sm:$0xf]
    %v80 = vld [vmem:[%s7 + $0x28] sm:$0xf]
    %v81 = vld [vmem:[%s7 + $0x2c] sm:$0xf]
    %v82 = vld [vmem:[%s7 + $0x30] sm:$0xf]
    %v83 = vld [vmem:[%s7 + $0x34] sm:$0xf]
    %v84 = vld [vmem:[%s7 + $0x38] sm:$0xf]
    %v85 = vld [vmem:[%s7 + $0x3c] sm:$0xf]
    %v86 = vld [vmem:[%s8] sm:$0x1]
    %v88 = vperm.slane %v86, 0
    %v103 = vunpack.c.l.b16 %v57
    %v104 = vunpack.c.l.b16 %v58
    %v105 = vunpack.c.l.b16 %v59
    %v106 = vunpack.c.l.b16 %v60
    %v107 = vunpack.c.l.b16 %v61
    %v108 = vunpack.c.l.b16 %v62
    %v109 = vunpack.c.l.b16 %v63
    %v110 = vunpack.c.l.b16 %v64
    %v111 = vunpack.c.l.b16 %v65
    %v112 = vunpack.c.l.b16 %v66
    %v113 = vunpack.c.l.b16 %v67
    %v114 = vunpack.c.l.b16 %v68
    %v115 = vunpack.c.l.b16 %v69
    %v116 = vpack.c.b16 %v104, %v103
    %v117 = vpack.c.b16 %v106, %v105
    %v118 = vpack.c.b16 %v108, %v107
    %v119 = vpack.c.b16 %v110, %v109
    %v120 = vpack.c.b16 %v112, %v111
    %v121 = vpack.c.b16 %v114, %v113
    %v122 = vpack.c.b16 %v115, %v115
    %v146 = vunpack.c.l.b16 %v70
    %v147 = vunpack.c.l.b16 %v71
    %v148 = vunpack.c.l.b16 %v72
    %v149 = vunpack.c.l.b16 %v73
    %v150 = vunpack.c.l.b16 %v74
    %v151 = vunpack.c.l.b16 %v75
    %v152 = vunpack.c.l.b16 %v76
    %v153 = vunpack.c.l.b16 %v77
    %v154 = vunpack.c.l.b16 %v78
    %v155 = vunpack.c.l.b16 %v79
    %v156 = vunpack.c.l.b16 %v80
    %v157 = vunpack.c.l.b16 %v81
    %v158 = vunpack.c.l.b16 %v82
    %v159 = vunpack.c.l.b16 %v83
    %v160 = vunpack.c.l.b16 %v84
    %v161 = vunpack.c.l.b16 %v85
    %v162 = vpack.c.b16 %v147, %v146
    %v163 = vpack.c.b16 %v149, %v148
    %v164 = vpack.c.b16 %v151, %v150
    %v165 = vpack.c.b16 %v153, %v152
    %v166 = vpack.c.b16 %v155, %v154
    %v167 = vpack.c.b16 %v157, %v156
    %v168 = vpack.c.b16 %v159, %v158
    %v169 = vpack.c.b16 %v161, %v160
    %178 = vmatpush.bf16.msra.mxu0 %v169
    %179 = vmatpush.bf16.msra.mxu0 %v168
    %180 = vmatpush.bf16.msra.mxu0 %v167
    %181 = vmatpush.bf16.msra.mxu0 %v166
    %182 = vmatpush.bf16.msra.mxu0 %v165
    %183 = vmatpush.bf16.msra.mxu0 %v164
    %184 = vmatpush.bf16.msra.mxu0 %v163
    %185 = vmatpush.bf16.msra.mxu0 %v162
    %186 = vmatmul.bf16.gmra.mxu0 %v116
    %v187 = vpop.f32.mrf.mxu0
    %v188 = vadd.f32 %v88, %v187
    %v189 = vpop.f32.mrf.mxu0
    %v190 = vadd.f32 %v88, %v189
    %191 = vmatmul.bf16.gmra.mxu0 %v117
    %v192 = vpop.f32.mrf.mxu0
    %v193 = vadd.f32 %v88, %v192
    %v194 = vpop.f32.mrf.mxu0
    %v195 = vadd.f32 %v88, %v194
    %196 = vmatmul.bf16.gmra.mxu0 %v118
    %v197 = vpop.f32.mrf.mxu0
    %v198 = vadd.f32 %v88, %v197
    %v199 = vpop.f32.mrf.mxu0
    %v200 = vadd.f32 %v88, %v199
    %201 = vmatmul.bf16.gmra.mxu0 %v119
    %v202 = vpop.f32.mrf.mxu0
    %v203 = vadd.f32 %v88, %v202
    %v204 = vpop.f32.mrf.mxu0
    %v205 = vadd.f32 %v88, %v204
    %206 = vmatmul.bf16.gmra.mxu0 %v120
    %v207 = vpop.f32.mrf.mxu0
    %v208 = vadd.f32 %v88, %v207
    %v209 = vpop.f32.mrf.mxu0
    %v210 = vadd.f32 %v88, %v209
    %211 = vmatmul.bf16.gmra.mxu0 %v121
    %v212 = vpop.f32.mrf.mxu0
    %v213 = vadd.f32 %v88, %v212
    %v214 = vpop.f32.mrf.mxu0
    %v215 = vadd.f32 %v88, %v214
    %216 = vmatmul.bf16.gmra.mxu0 %v122
    %v217 = vpop.f32.mrf.mxu0
    %v218 = vadd.f32 %v88, %v217
    %v219 = vpop.f32.mrf.mxu0
    %220 = vdwg.mxu0
    %v221 = vpack.c.bf16 %v190, %v188
    %v222 = vpack.c.bf16 %v195, %v193
    %v223 = vpack.c.bf16 %v200, %v198
    %v224 = vpack.c.bf16 %v205, %v203
    %v225 = vpack.c.bf16 %v210, %v208
    %v226 = vpack.c.bf16 %v215, %v213
    %v227 = vpack.c.bf16 %v218, %v218
    %v228 = vld [vmem:[%s0] sm:$0x1]
    %v229 = vpack.c.bf16 %v56, %v56
    %v231 = vunpack.c.l.b16 %v229
    %v232 = vpack.c.b16 %v231, %v231
    %233 = vrot.lane.b32.xlu0 %v232, 32
    %v234 = vpop.permute.xlu0 %233
    %vm235 = vcmask 261120
    %v238 = vsel %vm235, %v228, %v234
    %v239 = vld [vmem:[%s3] sm:$0xf]
    %v240 = vld [vmem:[%s3 + $0x4] sm:$0xf]
    %v241 = vld [vmem:[%s3 + $0x8] sm:$0xf]
    %v242 = vld [vmem:[%s3 + $0xc] sm:$0xf]
    %v243 = vld [vmem:[%s3 + $0x10] sm:$0xf]
    %v244 = vld [vmem:[%s3 + $0x14] sm:$0xf]
    %v245 = vld [vmem:[%s3 + $0x18] sm:$0xf]
    %v246 = vld [vmem:[%s3 + $0x1c] sm:$0xf]
    %v247 = vld [vmem:[%s4] sm:$0x1]
    %v249 = vperm.slane %v247, 0
    %v259 = vunpack.c.l.b16 %v239
    %v260 = vunpack.c.l.b16 %v240
    %v261 = vunpack.c.l.b16 %v241
    %v262 = vunpack.c.l.b16 %v242
    %v263 = vunpack.c.l.b16 %v243
    %v264 = vunpack.c.l.b16 %v244
    %v265 = vunpack.c.l.b16 %v245
    %v266 = vunpack.c.l.b16 %v246
    %v267 = vpack.c.b16 %v260, %v259
    %v268 = vpack.c.b16 %v262, %v261
    %v269 = vpack.c.b16 %v264, %v263
    %v270 = vpack.c.b16 %v266, %v265
    %vm275 = vcmask 523264
    %v276 = vsel %vm275, %v238, 0
    %278 = vmatpush.bf16.msra.mxu0 0
    %279 = vmatpush.bf16.msra.mxu0 0
    %280 = vmatpush.bf16.msra.mxu0 0
    %281 = vmatpush.bf16.msra.mxu0 0
    %282 = vmatpush.bf16.msra.mxu0 %v270
    %283 = vmatpush.bf16.msra.mxu0 %v269
    %284 = vmatpush.bf16.msra.mxu0 %v268
    %285 = vmatpush.bf16.msra.mxu0 %v267
    %286 = vmatmul.bf16.gmra.mxu0 %v276
    %v287 = vpop.f32.mrf.mxu0
    %v288 = vadd.f32 %v249, %v287
    %v289 = vpop.f32.mrf.mxu0
    %290 = vdwg.mxu0
    %v291 = vxor.u32 %v288, 2147483648
    %v292 = vmul.f32 %v291, 1.442695
    %v293 = vpow.pop %v292
    %v294 = vadd.f32 %v293, 1.0
    %v295 = vrcp.pop %v294
    %v296 = vmul.f32 %v294, %v295
    %v297 = vsub.f32 1.0, %v296
    %v298 = vmul.f32 %v295, %v297
    %v299 = vadd.f32 %v295, %v298
    %vm300 = vweird.f32 %v294
    %vm301 = vweird.f32 %v295
    %vm302 = vmor %vm300, %vm301
    %v303 = vsel %vm302, %v295, %v299
    %v304 = vand.u32 2147483647, %v294
    %vm305 = vcmp.eq.f32.partialorder %v304, 8.507059e+37
    %v306 = vand.u32 %v294, 2147483648
    %v307 = vor.u32 1.1754944e-38, %v306
    %v308 = vsel %vm305, %v307, %v303
    %v309 = vmul.f32 1.0, %v308
    %v310 = vlaneseq
    %v311 = vand.u32 %v310, 127
    %vm312 = vcmp.ge.s32.totalorder %v311, 64
    %vm313 = vcmp.lt.s32.totalorder %v311, 96
    %vm314 = vmand %vm312, %vm313
    %v315 = vmul.f32 %v309, 2.0
    %v316 = vsub.f32 %v315, 1.0
    %v317 = vsel %vm314, %v316, %v309
    %319 = vrot.lane.b32.xlu0 %v56, 96
    %v320 = vpop.permute.xlu0 %319
    %v322 = vmul.f32 %v317, %v320
    %324 = vrot.lane.b32.xlu0 %v317, 64
    %v325 = vpop.permute.xlu0 %324
    %v327 = vmul.f32 %v317, %v325
    %329 = vrot.lane.b32.xlu0 %v327, 32
    %v330 = vpop.permute.xlu0 %329
    %v332 = vadd.f32 %v322, %v330
    %v333 = vtanh.pop %v332
    %335 = vrot.lane.b32.xlu0 %v333, 64
    %v336 = vpop.permute.xlu0 %335
    %v338 = vmul.f32 %v317, %v336
    %v339 = vpack.c.bf16 %v338, %v338
    %v340 = vld [vmem:[%s5] sm:$0xf]
    %v341 = vld [vmem:[%s5 + $0x4] sm:$0xf]
    %v342 = vld [vmem:[%s5 + $0x8] sm:$0xf]
    %v343 = vld [vmem:[%s5 + $0xc] sm:$0xf]
    %v344 = vld [vmem:[%s6] sm:$0x1]
    %v346 = vperm.slane %v344, 0
    %349 = vrot.lane.b32.xlu0 %v339, 32
    %v350 = vpop.permute.xlu0 %349
    %v355 = vunpack.c.l.b16 %v340
    %v356 = vunpack.c.l.b16 %v341
    %v357 = vunpack.c.l.b16 %v342
    %v358 = vunpack.c.l.b16 %v343
    %v359 = vpack.c.b16 %v356, %v355
    %v360 = vpack.c.b16 %v358, %v357
    %v364 = vsel %vm235, %v350, 0
    %366 = vmatpush.bf16.msra.mxu0 0
    %367 = vmatpush.bf16.msra.mxu0 0
    %368 = vmatpush.bf16.msra.mxu0 0
    %369 = vmatpush.bf16.msra.mxu0 0
    %370 = vmatpush.bf16.msra.mxu0 0
    %371 = vmatpush.bf16.msra.mxu0 0
    %372 = vmatpush.bf16.msra.mxu0 %v360
    %373 = vmatpush.bf16.msra.mxu0 %v359
    %374 = vmatmul.bf16.gmra.mxu0 %v364
    %v375 = vpop.f32.mrf.mxu0
    %v376 = vadd.f32 %v346, %v375
    %v377 = vpop.f32.mrf.mxu0
    %378 = vdwg.mxu0
    %v379 = vpack.c.bf16 %v376, %v376
    %v381 = vsel %vm235, %v379, 0
    %v384 = vsel %vm235, %v221, 0
    %v387 = vsel %vm235, %v222, 0
    %v390 = vsel %vm235, %v223, 0
    %v393 = vsel %vm235, %v224, 0
    %v396 = vsel %vm235, %v225, 0
    %v399 = vsel %vm235, %v226, 0
    %v402 = vsel %vm235, %v227, 0
    %404 = vmatpush.bf16.xpose.msra.mxu0 0
    %405 = vmatpush.bf16.xpose.msra.mxu0 %v402
    %406 = vmatpush.bf16.xpose.msra.mxu0 %v399
    %407 = vmatpush.bf16.xpose.msra.mxu0 %v396
    %408 = vmatpush.bf16.xpose.msra.mxu0 %v393
    %409 = vmatpush.bf16.xpose.msra.mxu0 %v390
    %410 = vmatpush.bf16.xpose.msra.mxu0 %v387
    %411 = vmatpush.bf16.xpose.msra.mxu0 %v384
    %412 = vmatmul.bf16.gmra.mxu0 %v381
    %v413 = vpop.f32.mrf.mxu0
    %v414 = vadd.f32 0.0, %v413
    %v415 = vpop.f32.mrf.mxu0
    %416 = vdwg.mxu0
    %v417 = vlaneseq
    %v418 = vshrl.u32 %v417, 7
    %v419 = vmul.u32 %v418, 49
    %vm420 = vcmp.ge.s32.totalorder %v311, %v419
    %v421 = vadd.s32 %v419, 49
    %vm422 = vcmp.lt.s32.totalorder %v311, %v421
    %vm423 = vmand %vm420, %vm422
    %v424 = vsel %vm423, %v414, -1e+30
    %vm425 = vcmask 795648
    %v426 = vsel %vm425, %v424, -inf
    %427 = vmax.xlane.f32.xlu0 %v426
    %v428 = vpop.xlane.xlu0 %427
    %v429 = vsub.f32 %v424, %v428
    %v430 = vmul.f32 %v429, 1.442695
    %v431 = vpow.pop %v430
    %v432 = vsel %vm425, %v431, 0.0
    %433 = vadd.xlane.f32.xlu0 %v432
    %v434 = vpop.xlane.xlu0 %433
    %v435 = vrcp.pop %v434
    %v436 = vmul.f32 %v431, %v435
    %vm437 = vcmask 393216
    %438 = vst.msk [vmem:[#allocation4] sm:$0x1] %vm437, %v436
    %440 = vrot.lane.b32.xlu0 %v436, 79
    %v441 = vpop.permute.xlu0 %440
    %vm443 = vcmask 394241
    %444 = vst.msk [vmem:[#allocation4] sm:$0x2] %vm443, %v441
    %v445 = vpack.c.bf16 %v436, %v436
    %453 = vrot.lane.b32.xlu0 %v221, 96
    %v454 = vpop.permute.xlu0 %453
    %455 = vrot.lane.b32.xlu0 %v222, 96
    %v456 = vpop.permute.xlu0 %455
    %457 = vrot.lane.b32.xlu0 %v223, 96
    %v458 = vpop.permute.xlu0 %457
    %459 = vrot.lane.b32.xlu0 %v224, 96
    %v460 = vpop.permute.xlu0 %459
    %461 = vrot.lane.b32.xlu0 %v225, 96
    %v462 = vpop.permute.xlu0 %461
    %463 = vrot.lane.b32.xlu0 %v226, 96
    %v464 = vpop.permute.xlu0 %463
    %465 = vrot.lane.b32.xlu0 %v227, 96
    %v466 = vpop.permute.xlu0 %465
    %vm473 = vcmask 801792
    %v475 = vsel %vm473, %v445, 0
    %vm477 = vcmask 1040384
    %v479 = vsel %vm477, %v466, 0
    %481 = vmatpush.bf16.msra.mxu0 0
    %482 = vmatpush.bf16.msra.mxu0 %v479
    %483 = vmatpush.bf16.msra.mxu0 %v464
    %484 = vmatpush.bf16.msra.mxu0 %v462
    %485 = vmatpush.bf16.msra.mxu0 %v460
    %486 = vmatpush.bf16.msra.mxu0 %v458
    %487 = vmatpush.bf16.msra.mxu0 %v456
    %488 = vmatpush.bf16.msra.mxu0 %v454
    %489 = vmatmul.bf16.gmra.mxu0 %v475
    %v490 = vpop.f32.mrf.mxu0
    %v491 = vadd.f32 0.0, %v490
    %v492 = vpop.f32.mrf.mxu0
    %493 = vdwg.mxu0
    %v494 = vpack.c.bf16 %v491, %v491
    %v495 = vld [vmem:[%s9] sm:$0xf]
    %v496 = vld [vmem:[%s9 + $0x4] sm:$0xf]
    %v497 = vld [vmem:[%s9 + $0x8] sm:$0xf]
    %v498 = vld [vmem:[%s9 + $0xc] sm:$0xf]
    %v499 = vld [vmem:[%s10] sm:$0x1]
    %v501 = vperm.slane %v499, 0
    %v507 = vunpack.c.l.b16 %v495
    %v508 = vunpack.c.l.b16 %v496
    %v509 = vunpack.c.l.b16 %v497
    %v510 = vunpack.c.l.b16 %v498
    %v511 = vpack.c.b16 %v508, %v507
    %v512 = vpack.c.b16 %v510, %v509
    %v516 = vsel %vm235, %v494, 0
    %518 = vmatpush.bf16.msra.mxu0 0
    %519 = vmatpush.bf16.msra.mxu0 0
    %520 = vmatpush.bf16.msra.mxu0 0
    %521 = vmatpush.bf16.msra.mxu0 0
    %522 = vmatpush.bf16.msra.mxu0 0
    %523 = vmatpush.bf16.msra.mxu0 0
    %524 = vmatpush.bf16.msra.mxu0 %v512
    %525 = vmatpush.bf16.msra.mxu0 %v511
    %526 = vmatmul.bf16.gmra.mxu0 %v516
    %v527 = vpop.f32.mrf.mxu0
    %v528 = vadd.f32 %v501, %v527
    %v529 = vpop.f32.mrf.mxu0
    %530 = vdwg.mxu0
    %v531 = vpack.c.bf16 %v528, %v528
    %v534 = vsel %vm235, %v531, %v229
    %v535 = vld [vmem:[%s11] sm:$0xf]
    %v536 = vld [vmem:[%s11 + $0x4] sm:$0xf]
    %v537 = vld [vmem:[%s11 + $0x8] sm:$0xf]
    %v538 = vld [vmem:[%s11 + $0xc] sm:$0xf]
    %v539 = vld [vmem:[%s11 + $0x10] sm:$0xf]
    %v540 = vld [vmem:[%s11 + $0x14] sm:$0xf]
    %v541 = vld [vmem:[%s11 + $0x18] sm:$0xf]
    %v542 = vld [vmem:[%s11 + $0x1c] sm:$0xf]
    %v543 = vld [vmem:[%s12] sm:$0x1]
    %v545 = vperm.slane %v543, 0
    %v555 = vunpack.c.l.b16 %v535
    %v556 = vunpack.c.l.b16 %v536
    %v557 = vunpack.c.l.b16 %v537
    %v558 = vunpack.c.l.b16 %v538
    %v559 = vunpack.c.l.b16 %v539
    %v560 = vunpack.c.l.b16 %v540
    %v561 = vunpack.c.l.b16 %v541
    %v562 = vunpack.c.l.b16 %v542
    %v563 = vpack.c.b16 %v556, %v555
    %v564 = vpack.c.b16 %v558, %v557
    %v565 = vpack.c.b16 %v560, %v559
    %v566 = vpack.c.b16 %v562, %v561
    %v571 = vsel %vm275, %v534, 0
    %573 = vmatpush.bf16.msra.mxu0 0
    %574 = vmatpush.bf16.msra.mxu0 0
    %575 = vmatpush.bf16.msra.mxu0 0
    %576 = vmatpush.bf16.msra.mxu0 0
    %577 = vmatpush.bf16.msra.mxu0 %v566
    %578 = vmatpush.bf16.msra.mxu0 %v565
    %579 = vmatpush.bf16.msra.mxu0 %v564
    %580 = vmatpush.bf16.msra.mxu0 %v563
    %581 = vmatmul.bf16.gmra.mxu0 %v571
    %v582 = vpop.f32.mrf.mxu0
    %v583 = vadd.f32 %v545, %v582
    %v584 = vpop.f32.mrf.mxu0
    %585 = vdwg.mxu0
    %v586 = vxor.u32 %v583, 2147483648
    %v587 = vmul.f32 %v586, 1.442695
    %v588 = vpow.pop %v587
    %v589 = vadd.f32 %v588, 1.0
    %v590 = vrcp.pop %v589
    %v591 = vmul.f32 %v589, %v590
    %v592 = vsub.f32 1.0, %v591
    %v593 = vmul.f32 %v590, %v592
    %v594 = vadd.f32 %v590, %v593
    %vm595 = vweird.f32 %v589
    %vm596 = vweird.f32 %v590
    %vm597 = vmor %vm595, %vm596
    %v598 = vsel %vm597, %v590, %v594
    %v599 = vand.u32 2147483647, %v589
    %vm600 = vcmp.eq.f32.partialorder %v599, 8.507059e+37
    %v601 = vand.u32 %v589, 2147483648
    %v602 = vor.u32 1.1754944e-38, %v601
    %v603 = vsel %vm600, %v602, %v598
    %v604 = vmul.f32 1.0, %v603
    %v605 = vmul.f32 %v604, 2.0
    %v606 = vsub.f32 %v605, 1.0
    %v607 = vsel %vm314, %v606, %v604
    %608 = vrot.lane.b32.xlu0 %v56, 64
    %v609 = vpop.permute.xlu0 %608
    %v611 = vmul.f32 %v607, %v609
    %613 = vrot.lane.b32.xlu0 %v607, 64
    %v614 = vpop.permute.xlu0 %613
    %v616 = vmul.f32 %v607, %v614
    %618 = vrot.lane.b32.xlu0 %v616, 32
    %v619 = vpop.permute.xlu0 %618
    %v621 = vadd.f32 %v611, %v619
    %v622 = vtanh.pop %v621
    %624 = vrot.lane.b32.xlu0 %v622, 64
    %v625 = vpop.permute.xlu0 %624
    %v627 = vmul.f32 %v607, %v625
    %v628 = vpack.c.bf16 %v627, %v627
    %v629 = vld [vmem:[%s13] sm:$0xf]
    %v630 = vld [vmem:[%s13 + $0x4] sm:$0xf]
    %v631 = vld [vmem:[%s13 + $0x8] sm:$0xf]
    %v632 = vld [vmem:[%s13 + $0xc] sm:$0xf]
    %v633 = vld [vmem:[%s14] sm:$0x1]
    %v635 = vperm.slane %v633, 0
    %638 = vrot.lane.b32.xlu0 %v628, 32
    %v639 = vpop.permute.xlu0 %638
    %v644 = vunpack.c.l.b16 %v629
    %v645 = vunpack.c.l.b16 %v630
    %v646 = vunpack.c.l.b16 %v631
    %v647 = vunpack.c.l.b16 %v632
    %v648 = vpack.c.b16 %v645, %v644
    %v649 = vpack.c.b16 %v647, %v646
    %v653 = vsel %vm235, %v639, 0
    %655 = vmatpush.bf16.msra.mxu0 0
    %656 = vmatpush.bf16.msra.mxu0 0
    %657 = vmatpush.bf16.msra.mxu0 0
    %658 = vmatpush.bf16.msra.mxu0 0
    %659 = vmatpush.bf16.msra.mxu0 0
    %660 = vmatpush.bf16.msra.mxu0 0
    %661 = vmatpush.bf16.msra.mxu0 %v649
    %662 = vmatpush.bf16.msra.mxu0 %v648
    %663 = vmatmul.bf16.gmra.mxu0 %v653
    %v664 = vpop.f32.mrf.mxu0
    %v665 = vadd.f32 %v635, %v664
    %v666 = vpop.f32.mrf.mxu0
    %667 = vdwg.mxu0
    %668 = vst [vmem:[#allocation2] sm:$0x3] %v665
    %670 = vrot.lane.b32.xlu0 %v338, 32
    %v671 = vpop.permute.xlu0 %670
    %674 = vrot.lane.b32.xlu0 %v627, 64
    %v675 = vpop.permute.xlu0 %674
    %678 = vrot.lane.b32.xlu0 %v332, 32
    %v679 = vpop.permute.xlu0 %678
    %682 = vrot.lane.b32.xlu0 %v621, 64
    %v683 = vpop.permute.xlu0 %682
    %v685 = vsel %vm235, %v671, %v675
    %v686 = vsel %vm275, %v685, %v679
    %vm687 = vcmask 785408
    %v688 = vsel %vm687, %v686, %v683
    %689 = vst [vmem:[%s17] sm:$0x3] %v688
    // Predicated region
    $region62: #{_decoder_forward_impl.1} parent=1 // pred_check
      _
    $region63: #{_decoder_forward_impl.1} parent=1 // pred_check_branch
      %691 = sbr.rel (0) target = $region65
    $region64: #{_decoder_forward_impl.1} parent=1 // pred_region
      %693 = vsyncadd [#allocation3], 0
      %s695 = sshll.u32 [#allocation2], 4
      %s696 = int_to_ptr.vmem [resolvable:$true] %s695
      %s697 = sshll.u32 %s15, 4
      %s698 = int_to_ptr.hbm [resolvable:$true] %s697
      %700 = dma.vmem_to_hbm [thread:$0]  %s696, 32, %s698, [#allocation3]
    $region65: #{_decoder_forward_impl.1} parent=1 // pred_fallthru
      _
    // Predicated region
    $region66: #{_decoder_forward_impl.1} parent=1 // pred_check
      _
    $region67: #{_decoder_forward_impl.1} parent=1 // pred_check_branch
      %702 = sbr.rel (0) target = $region69
    $region68: #{_decoder_forward_impl.1} parent=1 // pred_region
      %704 = vsyncadd [#allocation5], 0
      %s706 = sshll.u32 [#allocation4], 4
      %s707 = int_to_ptr.vmem [resolvable:$true] %s706
      %s708 = sshll.u32 %s16, 4
      %s709 = int_to_ptr.hbm [resolvable:$true] %s708
      %711 = dma.vmem_to_hbm [thread:$0]  %s707, 32, %s709, [#allocation5]
    $region69: #{_decoder_forward_impl.1} parent=1 // pred_fallthru
      _
    // Predicated region
    $region70: #{_decoder_forward_impl.1} parent=1 // pred_check
      _
    $region71: #{_decoder_forward_impl.1} parent=1 // pred_check_branch
      %713 = sbr.rel (0) target = $region73
    $region72: #{_decoder_forward_impl.1} parent=1 // pred_region
      _
    $region73: #{_decoder_forward_impl.1} parent=1 // pred_fallthru
      _
    // Predicated region
    $region74: #{_decoder_forward_impl.1} parent=1 // pred_check
      _
    $region75: #{_decoder_forward_impl.1} parent=1 // pred_check_branch
      %715 = sbr.rel (0) target = $region77
    $region76: #{_decoder_forward_impl.1} parent=1 // pred_region
      %717 = dma.done [#allocation3], 32
    $region77: #{_decoder_forward_impl.1} parent=1 // pred_fallthru
      _
    // Predicated region
    $region78: #{_decoder_forward_impl.1} parent=1 // pred_check
      _
    $region79: #{_decoder_forward_impl.1} parent=1 // pred_check_branch
      %719 = sbr.rel (0) target = $region81
    $region80: #{_decoder_forward_impl.1} parent=1 // pred_region
      %721 = dma.done [#allocation5], 32
    $region81: #{_decoder_forward_impl.1} parent=1 // pred_fallthru
      _
    // Predicated region
    $region82: #{_decoder_forward_impl.1} parent=1 // pred_check
      _
    $region83: #{_decoder_forward_impl.1} parent=1 // pred_check_branch
      %723 = sbr.rel (0) target = $region85
    $region84: #{_decoder_forward_impl.1} parent=1 // pred_region
      _
    $region85: #{_decoder_forward_impl.1} parent=1 // pred_fallthru
      _
    %724 = vsyncpa [#allocation3], 1
    %725 = vsyncpa [#allocation5], 1

</llo_original>
